<compile_context>
chip_gen: v6e
topology: v6e:2x2x1
jax: 0.10.0
libtpu: 0.0.40
codegen_flags: <defaults>
</compile_context>

<pallas_src>
import functools

import jax
import jax.numpy as jnp
from jax.experimental import pallas as pl
from jax.experimental.pallas import tpu as pltpu


def _round_up(x, m):
    return (x + m - 1) // m * m


# ----------------------------------------------------------------------------
# Kernel
# ----------------------------------------------------------------------------
def abhead_kernel(x_ref, wd_ref, bd_ref, gamma_ref, beta_ref,
                  wdec_ref, bias_ref, out_ref, ln_scratch, *, eps):
    # NOTE: the LN-scratch caching below is only correct because the vocab
    # axis (grid axis 1) is the innermost grid axis and is marked "arbitrary"
    # (sequential).  Reordering the grid or marking axis 1 "parallel" would
    # read a stale / uninitialized ln_scratch for j > 0.
    j = pl.program_id(1)

    # ---- dense -> GELU -> LayerNorm: only once per row tile (j == 0) -------
    @pl.when(j == 0)
    def _():
        x = x_ref[...]                                           # (tm, H)
        h = jnp.dot(x, wd_ref[...], preferred_element_type=jnp.float32)
        h = h + bd_ref[...].astype(jnp.float32)                  # (1, H) bcast

        # exact (erf-based) GELU, matching torch F.gelu default
        g = 0.5 * h * (1.0 + jax.lax.erf(h * jnp.float32(0.7071067811865476)))

        # LayerNorm over hidden (last) axis, biased variance, eps inside rsqrt
        # (padded zero rows: centered == 0 so outputs stay finite).
        mean = jnp.mean(g, axis=-1, keepdims=True)
        centered = g - mean
        var = jnp.mean(centered * centered, axis=-1, keepdims=True)
        ln = centered * jax.lax.rsqrt(var + jnp.float32(eps))
        ln = (ln * gamma_ref[...].astype(jnp.float32)
              + beta_ref[...].astype(jnp.float32))
        ln_scratch[...] = ln.astype(ln_scratch.dtype)

    # ---- decoder: ln @ Wdec_tile + bias_tile --------------------------------
    logits = jnp.dot(ln_scratch[...], wdec_ref[...],
                     preferred_element_type=jnp.float32)          # (tm, tn)
    logits = logits + bias_ref[...].astype(jnp.float32)           # (1, tn)
    out_ref[...] = logits.astype(out_ref.dtype)


# ----------------------------------------------------------------------------
# One-time parameter preparation (hoisted out of the forward path)
# ----------------------------------------------------------------------------
def prepare_params(params, *, tn=2048, matmul_dtype=jnp.bfloat16):
    """Pre-transpose / pad / cast the AbHead weights once.

    matmul_dtype=bfloat16 is the production path (full MXU rate, half the
    weight-streaming bytes); float32 is intended for testing only.
    """
    H = params["dense_w"].shape[0]
    V = params["dec_w"].shape[0]

    # vocab tile: multiple of 128, never bigger than the 128-padded vocab
    tn = _round_up(min(tn, _round_up(V, 128)), 128)
    Vp = _round_up(V, tn)

    wdec_p = jnp.zeros((H, Vp), matmul_dtype).at[:, :V].set(
        params["dec_w"].T.astype(matmul_dtype))                   # (H, Vp)
    bias_p = jnp.zeros((1, Vp), jnp.float32).at[:, :V].set(
        params["dec_b"].reshape(1, V).astype(jnp.float32))

    return {
        "wd_t": params["dense_w"].T.astype(matmul_dtype),         # (H, H) in,out
        "bd": params["dense_b"].reshape(1, H).astype(jnp.float32),
        "gamma": params["ln_w"].reshape(1, H).astype(jnp.float32),
        "beta": params["ln_b"].reshape(1, H).astype(jnp.float32),
        "wdec_p": wdec_p,
        "bias_p": bias_p,
        "H": H, "V": V, "Vp": Vp, "tn": tn,
        "matmul_dtype": matmul_dtype,
    }


def _vmem_capacity_bytes():
    try:
        cap = getattr(pltpu.get_tpu_info(), "vmem_capacity_bytes", None)
        if cap:
            return int(cap)
    except Exception:
        pass
    return 128 * 2**20  # conservative v5e/v6e default


# ----------------------------------------------------------------------------
# Forward
# ----------------------------------------------------------------------------
def abhead_forward(features, prep, *, eps=1e-12, tm=512, out_dtype=None):
    """features: (batch, seq, hidden) -> (batch, seq, num_labels).

    `prep` must come from prepare_params() (weights already transposed /
    padded / cast -- no per-call weight traffic beyond the kernel itself).
    """
    B, S, H = features.shape
    assert H == prep["H"], "hidden size mismatch vs prepared params"
    V, Vp, tn = prep["V"], prep["Vp"], prep["tn"]
    matmul_dtype = prep["matmul_dtype"]
    out_dtype = features.dtype if out_dtype is None else out_dtype

    # ---- row tiling ---------------------------------------------------------
    M = B * S
    tm = _round_up(max(tm, 16), 16)
    # keep >= 2 row tiles when possible: grid axis 0 is "parallel" and is what
    # shards work across v7x's two TensorCores.
    two_tile_cap = _round_up(max((M + 1) // 2, 16), 16)
    tm = min(tm, _round_up(M, 16), two_tile_cap)
    Mp = _round_up(M, tm)

    x2d = features.reshape(M, H).astype(matmul_dtype)
    if Mp != M:
        # padded rows are finite through LN (centered == 0) and sliced off.
        x2d = jnp.pad(x2d, ((0, Mp - M), (0, 0)))

    grid = (Mp // tm, Vp // tn)
    n_row_tiles = grid[0]

    mm_bytes = jnp.dtype(matmul_dtype).itemsize
    ob = jnp.dtype(out_dtype).itemsize

    cost = pl.CostEstimate(
        flops=2 * Mp * H * H + 2 * Mp * H * Vp,
        transcendentals=Mp * H,
        bytes_accessed=(x2d.size * mm_bytes
                        + prep["wd_t"].size * mm_bytes
                        # decoder weight + bias are streamed once per row tile
                        + n_row_tiles * (prep["wdec_p"].size * mm_bytes
                                         + prep["bias_p"].size * 4)
                        + Mp * Vp * ob))

    vmem_cap = _vmem_capacity_bytes()

    def _run(single_buffer_invariants):
        if single_buffer_invariants:
            def _inv_spec(shape):
                return pl.BlockSpec(shape, lambda i, j: (0, 0),
                                    pipeline_mode=pl.Buffered(1))
            inv_bufs = 1
        else:
            def _inv_spec(shape):
                return pl.BlockSpec(shape, lambda i, j: (0, 0))
            inv_bufs = 2

        # ---- VMEM budget (streamed tiles double-buffered, invariants per
        #      the chosen buffering), capped below physical capacity ---------
        vmem_est = (2 * tm * H * mm_bytes                # x row tile
                    + inv_bufs * H * H * mm_bytes        # dense weight
                    + inv_bufs * 3 * H * 4               # bd / gamma / beta
                    + 2 * H * tn * mm_bytes              # decoder weight tile
                    + 2 * tn * 4                         # decoder bias tile
                    + 2 * tm * tn * ob                   # output tile
                    + tm * H * mm_bytes)                 # LN scratch
        vmem_limit = int(min(vmem_cap - 8 * 2**20,       # leave compiler headroom
                             max(int(vmem_est * 1.5) + (4 << 20), 16 * 2**20)))

        return pl.pallas_call(
            functools.partial(abhead_kernel, eps=eps),
            out_shape=jax.ShapeDtypeStruct((Mp, Vp), out_dtype),
            grid_spec=pltpu.PrefetchScalarGridSpec(
                num_scalar_prefetch=0,
                grid=grid,
                in_specs=[
                    pl.BlockSpec((tm, H), lambda i, j: (i, 0)),   # x row tile
                    _inv_spec((H, H)),                            # dense weight
                    _inv_spec((1, H)),                            # dense bias
                    _inv_spec((1, H)),                            # LN gamma
                    _inv_spec((1, H)),                            # LN beta
                    pl.BlockSpec((H, tn), lambda i, j: (0, j)),   # decoder wt tile
                    pl.BlockSpec((1, tn), lambda i, j: (0, j)),   # decoder bias
                ],
                out_specs=pl.BlockSpec((tm, tn), lambda i, j: (i, j)),
                scratch_shapes=[pltpu.VMEM((tm, H), matmul_dtype)],  # cached LN
            ),
            compiler_params=pltpu.CompilerParams(
                # rows are independent (megacore-shardable); the vocab axis
                # MUST stay innermost + sequential ("arbitrary") because j > 0
                # reuses the LN scratch written at j == 0.
                dimension_semantics=("parallel", "arbitrary"),
                vmem_limit_bytes=vmem_limit),
            cost_estimate=cost,
        )(x2d, prep["wd_t"], prep["bd"], prep["gamma"], prep["beta"],
          prep["wdec_p"], prep["bias_p"])

    try:
        out = _run(True)        # single-buffer the grid-invariant weights
    except Exception:
        out = _run(False)       # fallback: default double-buffering

    if Mp == M and Vp == V:
        return out.reshape(B, S, V)
    return out[:M, :V].reshape(B, S, V)


# ----------------------------------------------------------------------------
# Reference + params
# ----------------------------------------------------------------------------
def make_params(key, hidden, num_labels):
    k1, k2, k3 = jax.random.split(key, 3)
    scale = 0.02
    return {
        # PyTorch Linear weight layout: (out, in)
        "dense_w": scale * jax.random.normal(k1, (hidden, hidden), jnp.float32),
        "dense_b": scale * jax.random.normal(k2, (hidden,), jnp.float32),
        "ln_w": jnp.ones((hidden,), jnp.float32),
        "ln_b": jnp.zeros((hidden,), jnp.float32),
        "dec_w": scale * jax.random.normal(k3, (num_labels, hidden), jnp.float32),
        "dec_b": jnp.zeros((num_labels,), jnp.float32),  # self.bias (tied to decoder)
    }


def abhead_reference(features, params, eps=1e-12):
    """Pure-JAX reference mirroring the PyTorch forward."""
    x = features @ params["dense_w"].T + params["dense_b"]
    x = 0.5 * x * (1.0 + jax.lax.erf(x / jnp.sqrt(2.0)))
    mu = jnp.mean(x, axis=-1, keepdims=True)
    var = jnp.mean((x - mu) ** 2, axis=-1, keepdims=True)
    x = (x - mu) * jax.lax.rsqrt(var + eps)
    x = x * params["ln_w"] + params["ln_b"]
    return x @ params["dec_w"].T + params["dec_b"]


if __name__ == "__main__":
    batch, seq, hidden, num_labels = 2, 8, 32, 24
    eps = 1e-12

    key = jax.random.PRNGKey(0)
    kx, kp = jax.random.split(key)
    features = jax.random.normal(kx, (batch, seq, hidden), jnp.float32)
    params = make_params(kp, hidden, num_labels)

    ref = abhead_reference(features, params, eps=eps)

    # f32 matmul path (test-only): tight tolerance vs reference.
    prep_f32 = prepare_params(params, tn=2048, matmul_dtype=jnp.float32)
    out_f32 = abhead_forward(features, prep_f32, eps=eps, tm=512)
    out_f32 = jax.block_until_ready(out_f32)
    assert out_f32.shape == (batch, seq, num_labels)
    assert jnp.allclose(out_f32, ref, atol=1e-4, rtol=1e-4), "f32 mismatch vs reference"

    # bf16 matmul path (production: MXU-friendly operands, f32 accumulate).
    prep_bf16 = prepare_params(params, tn=2048, matmul_dtype=jnp.bfloat16)
    out_bf16 = abhead_forward(features, prep_bf16, eps=eps, tm=512)
    out_bf16 = jax.block_until_ready(out_bf16)
    assert out_bf16.shape == (batch, seq, num_labels)
    assert jnp.allclose(out_bf16, ref, atol=5e-2, rtol=5e-2), "bf16 mismatch vs reference"

    print("KERNEL_OK")
</pallas_src>

<mosaic_0001>
module attributes {stable_mosaic.version = 11 : i64} {
  func.func @abhead_kernel(%arg0: i32, %arg1: i32, %arg2: memref<16x32xf32, #tpu.memory_space<vmem>>, %arg3: memref<32x32xf32, #tpu.memory_space<vmem>>, %arg4: memref<1x32xf32, #tpu.memory_space<vmem>>, %arg5: memref<1x32xf32, #tpu.memory_space<vmem>>, %arg6: memref<1x32xf32, #tpu.memory_space<vmem>>, %arg7: memref<32x128xf32, #tpu.memory_space<vmem>>, %arg8: memref<1x128xf32, #tpu.memory_space<vmem>>, %arg9: memref<16x128xf32, #tpu.memory_space<vmem>>, %arg10: memref<16x32xf32, #tpu.memory_space<vmem>>) attributes {dimension_semantics = [#tpu.dimension_semantics<parallel>, #tpu.dimension_semantics<arbitrary>], iteration_bounds = array<i64: 1, 1>, scalar_prefetch = 0 : i64, scratch_operands = 1 : i64, tpu.core_type = #tpu.core_type<tc>, window_params = [{transform_indices = @transform_0, window_bounds = array<i64: 16, 32>}, {pipeline_mode = #tpu.pipeline_mode<synchronous>, transform_indices = @transform_1, window_bounds = array<i64: 32, 32>}, {pipeline_mode = #tpu.pipeline_mode<synchronous>, transform_indices = @transform_2, window_bounds = array<i64: 1, 32>}, {pipeline_mode = #tpu.pipeline_mode<synchronous>, transform_indices = @transform_3, window_bounds = array<i64: 1, 32>}, {pipeline_mode = #tpu.pipeline_mode<synchronous>, transform_indices = @transform_4, window_bounds = array<i64: 1, 32>}, {transform_indices = @transform_5, window_bounds = array<i64: 32, 128>}, {transform_indices = @transform_6, window_bounds = array<i64: 1, 128>}, {transform_indices = @transform_7, window_bounds = array<i64: 16, 128>}]} {
    %c0_i32 = arith.constant 0 : i32
    %0 = arith.cmpi eq, %arg1, %c0_i32 : i32
    %1 = arith.extui %0 : i1 to i32
    %c0_i32_0 = arith.constant 0 : i32
    %2 = arith.cmpi ne, %1, %c0_i32_0 : i32
    scf.if %2 {
      %c0_8 = arith.constant 0 : index
      %c0_9 = arith.constant 0 : index
      %10 = vector.load %arg2[%c0_8, %c0_9] : memref<16x32xf32, #tpu.memory_space<vmem>>, vector<16x32xf32>
      %c0_10 = arith.constant 0 : index
      %c0_11 = arith.constant 0 : index
      %11 = vector.load %arg3[%c0_10, %c0_11] : memref<32x32xf32, #tpu.memory_space<vmem>>, vector<32x32xf32>
      %cst_12 = arith.constant dense<0.000000e+00> : vector<16x32xf32>
      %12 = tpu.matmul %10, %11, %cst_12 {dimension_numbers = #tpu.dot_dimension_numbers<[1], [0], [0], [1], [0, 0, 1, 1], [], []>} : vector<16x32xf32>, vector<32x32xf32>, vector<16x32xf32> -> vector<16x32xf32>
      %c0_13 = arith.constant 0 : index
      %c0_14 = arith.constant 0 : index
      %13 = vector.load %arg4[%c0_13, %c0_14] : memref<1x32xf32, #tpu.memory_space<vmem>>, vector<1x32xf32>
      %14 = vector.broadcast %13 : vector<1x32xf32> to vector<16x32xf32>
      %15 = arith.addf %12, %14 : vector<16x32xf32>
      %cst_15 = arith.constant 5.000000e-01 : f32
      %16 = vector.broadcast %cst_15 : f32 to vector<16x32xf32>
      %17 = arith.mulf %16, %15 : vector<16x32xf32>
      %cst_16 = arith.constant 0.707106769 : f32
      %18 = vector.broadcast %cst_16 : f32 to vector<16x32xf32>
      %19 = arith.mulf %15, %18 : vector<16x32xf32>
      %20 = math.erf %19 : vector<16x32xf32>
      %cst_17 = arith.constant 1.000000e+00 : f32
      %21 = vector.broadcast %cst_17 : f32 to vector<16x32xf32>
      %22 = arith.addf %21, %20 : vector<16x32xf32>
      %23 = arith.mulf %17, %22 : vector<16x32xf32>
      %cst_18 = arith.constant dense<0.000000e+00> : vector<16xf32>
      %24 = vector.multi_reduction <add>, %23, %cst_18 [1] : vector<16x32xf32> to vector<16xf32>
      %25 = vector.shape_cast %24 : vector<16xf32> to vector<16x1xf32>
      %cst_19 = arith.constant 3.200000e+01 : f32
      %26 = vector.broadcast %cst_19 : f32 to vector<16x1xf32>
      %27 = arith.divf %25, %26 : vector<16x1xf32>
      %28 = vector.broadcast %27 : vector<16x1xf32> to vector<16x32xf32>
      %29 = arith.subf %23, %28 : vector<16x32xf32>
      %30 = arith.mulf %29, %29 : vector<16x32xf32>
      %cst_20 = arith.constant dense<0.000000e+00> : vector<16xf32>
      %31 = vector.multi_reduction <add>, %30, %cst_20 [1] : vector<16x32xf32> to vector<16xf32>
      %32 = vector.shape_cast %31 : vector<16xf32> to vector<16x1xf32>
      %cst_21 = arith.constant 3.200000e+01 : f32
      %33 = vector.broadcast %cst_21 : f32 to vector<16x1xf32>
      %34 = arith.divf %32, %33 : vector<16x1xf32>
      %cst_22 = arith.constant 9.99999996E-13 : f32
      %35 = vector.broadcast %cst_22 : f32 to vector<16x1xf32>
      %36 = arith.addf %34, %35 : vector<16x1xf32>
      %37 = math.rsqrt %36 : vector<16x1xf32>
      %38 = vector.broadcast %37 : vector<16x1xf32> to vector<16x32xf32>
      %39 = arith.mulf %29, %38 : vector<16x32xf32>
      %c0_23 = arith.constant 0 : index
      %c0_24 = arith.constant 0 : index
      %40 = vector.load %arg5[%c0_23, %c0_24] : memref<1x32xf32, #tpu.memory_space<vmem>>, vector<1x32xf32>
      %41 = vector.broadcast %40 : vector<1x32xf32> to vector<16x32xf32>
      %42 = arith.mulf %39, %41 : vector<16x32xf32>
      %c0_25 = arith.constant 0 : index
      %c0_26 = arith.constant 0 : index
      %43 = vector.load %arg6[%c0_25, %c0_26] : memref<1x32xf32, #tpu.memory_space<vmem>>, vector<1x32xf32>
      %44 = vector.broadcast %43 : vector<1x32xf32> to vector<16x32xf32>
      %45 = arith.addf %42, %44 : vector<16x32xf32>
      %c0_27 = arith.constant 0 : index
      %c0_28 = arith.constant 0 : index
      %46 = vector.load %arg10[%c0_27, %c0_28] : memref<16x32xf32, #tpu.memory_space<vmem>>, vector<16x32xf32>
      tpu.vector_store %arg10[%c0_27, %c0_28], %45 {strides = array<i32>} : memref<16x32xf32, #tpu.memory_space<vmem>>, vector<16x32xf32>,
    } else {
    }
    %c0 = arith.constant 0 : index
    %c0_1 = arith.constant 0 : index
    %3 = vector.load %arg10[%c0, %c0_1] : memref<16x32xf32, #tpu.memory_space<vmem>>, vector<16x32xf32>
    %c0_2 = arith.constant 0 : index
    %c0_3 = arith.constant 0 : index
    %4 = vector.load %arg7[%c0_2, %c0_3] : memref<32x128xf32, #tpu.memory_space<vmem>>, vector<32x128xf32>
    %cst = arith.constant dense<0.000000e+00> : vector<16x128xf32>
    %5 = tpu.matmul %3, %4, %cst {dimension_numbers = #tpu.dot_dimension_numbers<[1], [0], [0], [1], [0, 0, 1, 1], [], []>} : vector<16x32xf32>, vector<32x128xf32>, vector<16x128xf32> -> vector<16x128xf32>
    %c0_4 = arith.constant 0 : index
    %c0_5 = arith.constant 0 : index
    %6 = vector.load %arg8[%c0_4, %c0_5] : memref<1x128xf32, #tpu.memory_space<vmem>>, vector<1x128xf32>
    %7 = vector.broadcast %6 : vector<1x128xf32> to vector<16x128xf32>
    %8 = arith.addf %5, %7 : vector<16x128xf32>
    %c0_6 = arith.constant 0 : index
    %c0_7 = arith.constant 0 : index
    %9 = vector.load %arg9[%c0_6, %c0_7] : memref<16x128xf32, #tpu.memory_space<vmem>>, vector<16x128xf32>
    tpu.vector_store %arg9[%c0_6, %c0_7], %8 {strides = array<i32>} : memref<16x128xf32, #tpu.memory_space<vmem>>, vector<16x128xf32>,
    return
  }
  func.func @transform_0(%arg0: i32, %arg1: i32) -> (i32, i32) {
    %c0_i32 = arith.constant 0 : i32
    %c0_i32_0 = arith.constant 0 : i32
    return %arg0, %c0_i32 : i32, i32
  }
  func.func @transform_1(%arg0: i32, %arg1: i32) -> (i32, i32) {
    %c0_i32 = arith.constant 0 : i32
    %c0_i32_0 = arith.constant 0 : i32
    %c0_i32_1 = arith.constant 0 : i32
    return %c0_i32, %c0_i32_0 : i32, i32
  }
  func.func @transform_2(%arg0: i32, %arg1: i32) -> (i32, i32) {
    %c0_i32 = arith.constant 0 : i32
    %c0_i32_0 = arith.constant 0 : i32
    %c0_i32_1 = arith.constant 0 : i32
    return %c0_i32, %c0_i32_0 : i32, i32
  }
  func.func @transform_3(%arg0: i32, %arg1: i32) -> (i32, i32) {
    %c0_i32 = arith.constant 0 : i32
    %c0_i32_0 = arith.constant 0 : i32
    %c0_i32_1 = arith.constant 0 : i32
    return %c0_i32, %c0_i32_0 : i32, i32
  }
  func.func @transform_4(%arg0: i32, %arg1: i32) -> (i32, i32) {
    %c0_i32 = arith.constant 0 : i32
    %c0_i32_0 = arith.constant 0 : i32
    %c0_i32_1 = arith.constant 0 : i32
    return %c0_i32, %c0_i32_0 : i32, i32
  }
  func.func @transform_5(%arg0: i32, %arg1: i32) -> (i32, i32) {
    %c0_i32 = arith.constant 0 : i32
    %c0_i32_0 = arith.constant 0 : i32
    return %c0_i32, %arg1 : i32, i32
  }
  func.func @transform_6(%arg0: i32, %arg1: i32) -> (i32, i32) {
    %c0_i32 = arith.constant 0 : i32
    %c0_i32_0 = arith.constant 0 : i32
    return %c0_i32, %arg1 : i32, i32
  }
  func.func @transform_7(%arg0: i32, %arg1: i32) -> (i32, i32) {
    %c0_i32 = arith.constant 0 : i32
    return %arg0, %arg1 : i32, i32
  }
}

module attributes {stable_mosaic.version = 11 : i64} {
  func.func @abhead_kernel(%arg0: i32, %arg1: i32, %arg2: memref<16x32xf32, #tpu.memory_space<vmem>>, %arg3: memref<32x32xf32, #tpu.memory_space<vmem>>, %arg4: memref<1x32xf32, #tpu.memory_space<vmem>>, %arg5: memref<1x32xf32, #tpu.memory_space<vmem>>, %arg6: memref<1x32xf32, #tpu.memory_space<vmem>>, %arg7: memref<32x128xf32, #tpu.memory_space<vmem>>, %arg8: memref<1x128xf32, #tpu.memory_space<vmem>>, %arg9: memref<16x128xf32, #tpu.memory_space<vmem>>, %arg10: memref<16x32xf32, #tpu.memory_space<vmem>>) attributes {dimension_semantics = [#tpu.dimension_semantics<parallel>, #tpu.dimension_semantics<arbitrary>], iteration_bounds = array<i64: 1, 1>, scalar_prefetch = 0 : i64, scratch_operands = 1 : i64, tpu.core_type = #tpu.core_type<tc>, window_params = [{transform_indices = @transform_0, window_bounds = array<i64: 16, 32>}, {pipeline_mode = #tpu.pipeline_mode<synchronous>, transform_indices = @transform_1, window_bounds = array<i64: 32, 32>}, {pipeline_mode = #tpu.pipeline_mode<synchronous>, transform_indices = @transform_2, window_bounds = array<i64: 1, 32>}, {pipeline_mode = #tpu.pipeline_mode<synchronous>, transform_indices = @transform_3, window_bounds = array<i64: 1, 32>}, {pipeline_mode = #tpu.pipeline_mode<synchronous>, transform_indices = @transform_4, window_bounds = array<i64: 1, 32>}, {transform_indices = @transform_5, window_bounds = array<i64: 32, 128>}, {transform_indices = @transform_6, window_bounds = array<i64: 1, 128>}, {transform_indices = @transform_7, window_bounds = array<i64: 16, 128>}]} {
    %c0_i32 = arith.constant 0 : i32
    %0 = arith.cmpi eq, %arg1, %c0_i32 : i32
    %1 = arith.extui %0 : i1 to i32
    %c0_i32_0 = arith.constant 0 : i32
    %2 = arith.cmpi ne, %1, %c0_i32_0 : i32
    scf.if %2 {
      %c0_8 = arith.constant 0 : index
      %c0_9 = arith.constant 0 : index
      %10 = vector.load %arg2[%c0_8, %c0_9] : memref<16x32xf32, #tpu.memory_space<vmem>>, vector<16x32xf32>
      %c0_10 = arith.constant 0 : index
      %c0_11 = arith.constant 0 : index
      %11 = vector.load %arg3[%c0_10, %c0_11] : memref<32x32xf32, #tpu.memory_space<vmem>>, vector<32x32xf32>
      %cst_12 = arith.constant dense<0.000000e+00> : vector<16x32xf32>
      %12 = tpu.matmul %10, %11, %cst_12 {dimension_numbers = #tpu.dot_dimension_numbers<[1], [0], [0], [1], [0, 0, 1, 1], [], []>} : vector<16x32xf32>, vector<32x32xf32>, vector<16x32xf32> -> vector<16x32xf32>
      %c0_13 = arith.constant 0 : index
      %c0_14 = arith.constant 0 : index
      %13 = vector.load %arg4[%c0_13, %c0_14] : memref<1x32xf32, #tpu.memory_space<vmem>>, vector<1x32xf32>
      %14 = vector.broadcast %13 : vector<1x32xf32> to vector<16x32xf32>
      %15 = arith.addf %12, %14 : vector<16x32xf32>
      %cst_15 = arith.constant 5.000000e-01 : f32
      %16 = vector.broadcast %cst_15 : f32 to vector<16x32xf32>
      %17 = arith.mulf %16, %15 : vector<16x32xf32>
      %cst_16 = arith.constant 0.707106769 : f32
      %18 = vector.broadcast %cst_16 : f32 to vector<16x32xf32>
      %19 = arith.mulf %15, %18 : vector<16x32xf32>
      %20 = math.erf %19 : vector<16x32xf32>
      %cst_17 = arith.constant 1.000000e+00 : f32
      %21 = vector.broadcast %cst_17 : f32 to vector<16x32xf32>
      %22 = arith.addf %21, %20 : vector<16x32xf32>
      %23 = arith.mulf %17, %22 : vector<16x32xf32>
      %cst_18 = arith.constant dense<0.000000e+00> : vector<16xf32>
      %24 = vector.multi_reduction <add>, %23, %cst_18 [1] : vector<16x32xf32> to vector<16xf32>
      %25 = vector.shape_cast %24 : vector<16xf32> to vector<16x1xf32>
      %cst_19 = arith.constant 3.200000e+01 : f32
      %26 = vector.broadcast %cst_19 : f32 to vector<16x1xf32>
      %27 = arith.divf %25, %26 : vector<16x1xf32>
      %28 = vector.broadcast %27 : vector<16x1xf32> to vector<16x32xf32>
      %29 = arith.subf %23, %28 : vector<16x32xf32>
      %30 = arith.mulf %29, %29 : vector<16x32xf32>
      %cst_20 = arith.constant dense<0.000000e+00> : vector<16xf32>
      %31 = vector.multi_reduction <add>, %30, %cst_20 [1] : vector<16x32xf32> to vector<16xf32>
      %32 = vector.shape_cast %31 : vector<16xf32> to vector<16x1xf32>
      %cst_21 = arith.constant 3.200000e+01 : f32
      %33 = vector.broadcast %cst_21 : f32 to vector<16x1xf32>
      %34 = arith.divf %32, %33 : vector<16x1xf32>
      %cst_22 = arith.constant 9.99999996E-13 : f32
      %35 = vector.broadcast %cst_22 : f32 to vector<16x1xf32>
      %36 = arith.addf %34, %35 : vector<16x1xf32>
      %37 = math.rsqrt %36 : vector<16x1xf32>
      %38 = vector.broadcast %37 : vector<16x1xf32> to vector<16x32xf32>
      %39 = arith.mulf %29, %38 : vector<16x32xf32>
      %c0_23 = arith.constant 0 : index
      %c0_24 = arith.constant 0 : index
      %40 = vector.load %arg5[%c0_23, %c0_24] : memref<1x32xf32, #tpu.memory_space<vmem>>, vector<1x32xf32>
      %41 = vector.broadcast %40 : vector<1x32xf32> to vector<16x32xf32>
      %42 = arith.mulf %39, %41 : vector<16x32xf32>
      %c0_25 = arith.constant 0 : index
      %c0_26 = arith.constant 0 : index
      %43 = vector.load %arg6[%c0_25, %c0_26] : memref<1x32xf32, #tpu.memory_space<vmem>>, vector<1x32xf32>
      %44 = vector.broadcast %43 : vector<1x32xf32> to vector<16x32xf32>
      %45 = arith.addf %42, %44 : vector<16x32xf32>
      %c0_27 = arith.constant 0 : index
      %c0_28 = arith.constant 0 : index
      %46 = vector.load %arg10[%c0_27, %c0_28] : memref<16x32xf32, #tpu.memory_space<vmem>>, vector<16x32xf32>
      tpu.vector_store %arg10[%c0_27, %c0_28], %45 {strides = array<i32>} : memref<16x32xf32, #tpu.memory_space<vmem>>, vector<16x32xf32>,
    } else {
    }
    %c0 = arith.constant 0 : index
    %c0_1 = arith.constant 0 : index
    %3 = vector.load %arg10[%c0, %c0_1] : memref<16x32xf32, #tpu.memory_space<vmem>>, vector<16x32xf32>
    %c0_2 = arith.constant 0 : index
    %c0_3 = arith.constant 0 : index
    %4 = vector.load %arg7[%c0_2, %c0_3] : memref<32x128xf32, #tpu.memory_space<vmem>>, vector<32x128xf32>
    %cst = arith.constant dense<0.000000e+00> : vector<16x128xf32>
    %5 = tpu.matmul %3, %4, %cst {dimension_numbers = #tpu.dot_dimension_numbers<[1], [0], [0], [1], [0, 0, 1, 1], [], []>} : vector<16x32xf32>, vector<32x128xf32>, vector<16x128xf32> -> vector<16x128xf32>
    %c0_4 = arith.constant 0 : index
    %c0_5 = arith.constant 0 : index
    %6 = vector.load %arg8[%c0_4, %c0_5] : memref<1x128xf32, #tpu.memory_space<vmem>>, vector<1x128xf32>
    %7 = vector.broadcast %6 : vector<1x128xf32> to vector<16x128xf32>
    %8 = arith.addf %5, %7 : vector<16x128xf32>
    %c0_6 = arith.constant 0 : index
    %c0_7 = arith.constant 0 : index
    %9 = vector.load %arg9[%c0_6, %c0_7] : memref<16x128xf32, #tpu.memory_space<vmem>>, vector<16x128xf32>
    tpu.vector_store %arg9[%c0_6, %c0_7], %8 {strides = array<i32>} : memref<16x128xf32, #tpu.memory_space<vmem>>, vector<16x128xf32>,
    return
  }
  func.func @transform_0(%arg0: i32, %arg1: i32) -> (i32, i32) {
    %c0_i32 = arith.constant 0 : i32
    %c0_i32_0 = arith.constant 0 : i32
    return %arg0, %c0_i32 : i32, i32
  }
  func.func @transform_1(%arg0: i32, %arg1: i32) -> (i32, i32) {
    %c0_i32 = arith.constant 0 : i32
    %c0_i32_0 = arith.constant 0 : i32
    %c0_i32_1 = arith.constant 0 : i32
    return %c0_i32, %c0_i32_0 : i32, i32
  }
  func.func @transform_2(%arg0: i32, %arg1: i32) -> (i32, i32) {
    %c0_i32 = arith.constant 0 : i32
    %c0_i32_0 = arith.constant 0 : i32
    %c0_i32_1 = arith.constant 0 : i32
    return %c0_i32, %c0_i32_0 : i32, i32
  }
  func.func @transform_3(%arg0: i32, %arg1: i32) -> (i32, i32) {
    %c0_i32 = arith.constant 0 : i32
    %c0_i32_0 = arith.constant 0 : i32
    %c0_i32_1 = arith.constant 0 : i32
    return %c0_i32, %c0_i32_0 : i32, i32
  }
  func.func @transform_4(%arg0: i32, %arg1: i32) -> (i32, i32) {
    %c0_i32 = arith.constant 0 : i32
    %c0_i32_0 = arith.constant 0 : i32
    %c0_i32_1 = arith.constant 0 : i32
    return %c0_i32, %c0_i32_0 : i32, i32
  }
  func.func @transform_5(%arg0: i32, %arg1: i32) -> (i32, i32) {
    %c0_i32 = arith.constant 0 : i32
    %c0_i32_0 = arith.constant 0 : i32
    return %c0_i32, %arg1 : i32, i32
  }
  func.func @transform_6(%arg0: i32, %arg1: i32) -> (i32, i32) {
    %c0_i32 = arith.constant 0 : i32
    %c0_i32_0 = arith.constant 0 : i32
    return %c0_i32, %arg1 : i32, i32
  }
  func.func @transform_7(%arg0: i32, %arg1: i32) -> (i32, i32) {
    %c0_i32 = arith.constant 0 : i32
    return %arg0, %arg1 : i32, i32
  }
}

</mosaic_0001>

<llo_original>
// kernel: tpu_custom_call.1
$region0: #{tpu_custom_call.1}
  #allocation0 [shape = 'u32[]', space=smem, size = 0x4, offset = 0x4, fixed_abs, tag = 'smem constant byte address 0x4 - core index']
  #allocation1 [shape = 'u32[144,128]{1,0:T(1,128)}', space=vmem, size = 0x12000, scoped, tag = 'internal scratch']
  #allocation2 [shape = 'f32[16,32]{1,0:T(8,128)}', space=vmem, size = 0x2000, scoped, tag = 'scratch operand']
  %s0 = inlined_call_operand.hbm [shape: f32[16,32], index: 0, kind: input, shape index: {}]
  %s1 = inlined_call_operand.hbm [shape: f32[32,32], index: 1, kind: input, shape index: {}]
  %s2 = inlined_call_operand.vmem [shape: f32[1,32], index: 2, kind: input, shape index: {}]
  %s3 = inlined_call_operand.vmem [shape: f32[1,32], index: 3, kind: input, shape index: {}]
  %s4 = inlined_call_operand.vmem [shape: f32[1,32], index: 4, kind: input, shape index: {}]
  %s5 = inlined_call_operand.hbm [shape: f32[32,128], index: 5, kind: input, shape index: {}]
  %s6 = inlined_call_operand.vmem [shape: f32[1,128], index: 6, kind: input, shape index: {}]
  %s7 = inlined_call_operand.hbm [shape: f32[16,128], index: 7, kind: output, shape index: {}]
  %s8 = sld [smem:[#allocation0]]
  $region54: #{tpu_custom_call.1} parent=0
    _
  %s10 = ssub.s32 1, %s8
  %s11 = scalar_select 0, %s10, %s8
  $region1: #{tpu_custom_call.1} parent=0
    #allocation3 [shape = 'u8[8192]{0}', space=vmem, size = 0x2000, scoped, tag = 'input window, operand 0, single buffered']
    #allocation4 [shape = 's32[1]{0}', space=sflag, size = 0x4, scoped, tag = 'scoped memory for tpu_custom_call.1']
    #allocation5 [shape = 's32[1]{0}', space=sflag, size = 0x4, scoped, tag = 'scoped memory for tpu_custom_call.1']
    #allocation6 [shape = 'u8[16384]{0}', space=vmem, size = 0x4000, scoped, tag = 'input window, operand 1, single buffered']
    #allocation7 [shape = 's32[1]{0}', space=sflag, size = 0x4, scoped, tag = 'scoped memory for tpu_custom_call.1']
    #allocation8 [shape = 'u8[16384]{0}', space=vmem, size = 0x4000, scoped, tag = 'input window, operand 5, single buffered']
    #allocation9 [shape = 'u8[8192]{0}', space=vmem, size = 0x2000, scoped, tag = 'output window, operand 0, single buffered']
    %12 = vsyncpa [#allocation4], 0
    %13 = vsyncpa [#allocation7], 0
    %14 = vsyncpa [#allocation5], 0
    // Predicated region
    $region2: #{tpu_custom_call.1} parent=1 // pred_check
      _
    $region3: #{tpu_custom_call.1} parent=1 // pred_check_branch
      %16 = sbr.rel (0) target = $region5
    $region4: #{tpu_custom_call.1} parent=1 // pred_region
      %s18 = ssub.s32 256, 256
      %19 = vsyncadd [#allocation4], %s18
      %s20 = sshll.u32 [#allocation3], 4
      %s21 = int_to_ptr.vmem [resolvable:$true] %s20
      %26 = dma.hbm_to_vmem [thread:$0]  %s0, 256, %s21, [#allocation4], 128, 128, 8
    $region5: #{tpu_custom_call.1} parent=1 // pred_fallthru
      _
    // Predicated region
    $region6: #{tpu_custom_call.1} parent=1 // pred_check
      _
    $region7: #{tpu_custom_call.1} parent=1 // pred_check_branch
      %28 = sbr.rel (0) target = $region9
    $region8: #{tpu_custom_call.1} parent=1 // pred_region
      %s30 = ssub.s32 512, 512
      %31 = vsyncadd [#allocation7], %s30
      %s32 = sshll.u32 [#allocation6], 4
      %s33 = int_to_ptr.vmem [resolvable:$true] %s32
      %38 = dma.hbm_to_vmem [thread:$0]  %s1, 512, %s33, [#allocation7], 128, 128, 8
    $region9: #{tpu_custom_call.1} parent=1 // pred_fallthru
      _
    // Predicated region
    $region10: #{tpu_custom_call.1} parent=1 // pred_check
      _
    $region11: #{tpu_custom_call.1} parent=1 // pred_check_branch
      %40 = sbr.rel (0) target = $region13
    $region12: #{tpu_custom_call.1} parent=1 // pred_region
      _
    $region13: #{tpu_custom_call.1} parent=1 // pred_fallthru
      _
    // Predicated region
    $region14: #{tpu_custom_call.1} parent=1 // pred_check
      _
    $region15: #{tpu_custom_call.1} parent=1 // pred_check_branch
      %42 = sbr.rel (0) target = $region17
    $region16: #{tpu_custom_call.1} parent=1 // pred_region
      _
    $region17: #{tpu_custom_call.1} parent=1 // pred_fallthru
      _
    // Predicated region
    $region18: #{tpu_custom_call.1} parent=1 // pred_check
      _
    $region19: #{tpu_custom_call.1} parent=1 // pred_check_branch
      %44 = sbr.rel (0) target = $region21
    $region20: #{tpu_custom_call.1} parent=1 // pred_region
      _
    $region21: #{tpu_custom_call.1} parent=1 // pred_fallthru
      _
    // Predicated region
    $region22: #{tpu_custom_call.1} parent=1 // pred_check
      _
    $region23: #{tpu_custom_call.1} parent=1 // pred_check_branch
      %46 = sbr.rel (0) target = $region25
    $region24: #{tpu_custom_call.1} parent=1 // pred_region
      %s48 = ssub.s32 512, 512
      %49 = vsyncadd [#allocation7], %s48
      %s50 = sshll.u32 [#allocation8], 4
      %s51 = int_to_ptr.vmem [resolvable:$true] %s50
      %56 = dma.hbm_to_vmem [thread:$0]  %s5, 512, %s51, [#allocation7], 128, 128, 8
    $region25: #{tpu_custom_call.1} parent=1 // pred_fallthru
      _
    // Predicated region
    $region26: #{tpu_custom_call.1} parent=1 // pred_check
      _
    $region27: #{tpu_custom_call.1} parent=1 // pred_check_branch
      %58 = sbr.rel (0) target = $region29
    $region28: #{tpu_custom_call.1} parent=1 // pred_region
      _
    $region29: #{tpu_custom_call.1} parent=1 // pred_fallthru
      _
    // Predicated region
    $region30: #{tpu_custom_call.1} parent=1 // pred_check
      _
    $region31: #{tpu_custom_call.1} parent=1 // pred_check_branch
      %60 = sbr.rel (0) target = $region33
    $region32: #{tpu_custom_call.1} parent=1 // pred_region
      %61 = dma.done [#allocation4], 256
    $region33: #{tpu_custom_call.1} parent=1 // pred_fallthru
      _
    // Predicated region
    $region34: #{tpu_custom_call.1} parent=1 // pred_check
      _
    $region35: #{tpu_custom_call.1} parent=1 // pred_check_branch
      %63 = sbr.rel (0) target = $region37
    $region36: #{tpu_custom_call.1} parent=1 // pred_region
      %64 = dma.done [#allocation7], 512
    $region37: #{tpu_custom_call.1} parent=1 // pred_fallthru
      _
    // Predicated region
    $region38: #{tpu_custom_call.1} parent=1 // pred_check
      _
    $region39: #{tpu_custom_call.1} parent=1 // pred_check_branch
      %66 = sbr.rel (0) target = $region41
    $region40: #{tpu_custom_call.1} parent=1 // pred_region
      %67 = dma.done [#allocation7], 512
    $region41: #{tpu_custom_call.1} parent=1 // pred_fallthru
      _
    %p68 = scmp.eq.s32.totalorder 0, 0
    // Predicated region
    $region42: #{tpu_custom_call.1} parent=1 // pred_check
      %p69 = pneg %p68
    $region43: #{tpu_custom_call.1} parent=1 // pred_check_branch
      %71 = sbr.rel (%p69) target = $region45
    $region44: #{tpu_custom_call.1} parent=1 // pred_region
      %v72 = vld [vmem:[#allocation3] sm:$0xff]
      %v73 = vld [vmem:[#allocation3 + $0x8] sm:$0xff]
      %v74 = vld [vmem:[#allocation6] sm:$0xff]
      %v75 = vld [vmem:[#allocation6 + $0x8] sm:$0xff]
      %v76 = vld [vmem:[#allocation6 + $0x10] sm:$0xff]
      %v77 = vld [vmem:[#allocation6 + $0x18] sm:$0xff]
      %v78 = vld [vmem:[%s2] sm:$0x1]
      %v80 = vlaneseq
      %v81 = vshrl.u32 %v80, 7
      %v82 = vsub.s32 0, %v81
      %v83 = vrot.slane %v78, %v82
      %vm85 = vcmask 261120
      %v87 = vsel %vm85, %v72, 0
      %v90 = vsel %vm85, %v73, 0
      %92 = vmatprep.subr.mxu0 0.0
      %93 = vmatpush1.msra.mxu0 0.0
      %94 = vmatprep.subr.mxu0 0.0
      %95 = vmatpush1.msra.mxu0 0.0
      %96 = vmatprep.subr.mxu0 0.0
      %97 = vmatpush1.msra.mxu0 0.0
      %98 = vmatprep.subr.mxu0 0.0
      %99 = vmatpush1.msra.mxu0 0.0
      %100 = vmatprep.subr.mxu0 0.0
      %101 = vmatpush1.msra.mxu0 0.0
      %102 = vmatprep.subr.mxu0 0.0
      %103 = vmatpush1.msra.mxu0 0.0
      %104 = vmatprep.subr.mxu0 0.0
      %105 = vmatpush1.msra.mxu0 0.0
      %106 = vmatprep.subr.mxu0 0.0
      %107 = vmatpush1.msra.mxu0 0.0
      %108 = vmatprep.subr.mxu0 0.0
      %109 = vmatpush1.msra.mxu0 0.0
      %110 = vmatprep.subr.mxu0 0.0
      %111 = vmatpush1.msra.mxu0 0.0
      %112 = vmatprep.subr.mxu0 0.0
      %113 = vmatpush1.msra.mxu0 0.0
      %114 = vmatprep.subr.mxu0 0.0
      %115 = vmatpush1.msra.mxu0 0.0
      %116 = vmatprep.subr.mxu0 0.0
      %117 = vmatpush1.msra.mxu0 %v77
      %118 = vmatprep.subr.mxu0 0.0
      %119 = vmatpush1.msra.mxu0 %v76
      %120 = vmatprep.subr.mxu0 0.0
      %121 = vmatpush1.msra.mxu0 %v75
      %122 = vmatprep.subr.mxu0 0.0
      %123 = vmatpush1.msra.mxu0 %v74
      %124 = vmatprep.subr.mxu0 0.0
      %125 = vmatpush2.msra.mxu0 0.0
      %126 = vmatprep.subr.mxu0 0.0
      %127 = vmatpush2.msra.mxu0 0.0
      %128 = vmatprep.subr.mxu0 0.0
      %129 = vmatpush2.msra.mxu0 0.0
      %130 = vmatprep.subr.mxu0 0.0
      %131 = vmatpush2.msra.mxu0 0.0
      %132 = vmatprep.subr.mxu0 0.0
      %133 = vmatpush2.msra.mxu0 0.0
      %134 = vmatprep.subr.mxu0 0.0
      %135 = vmatpush2.msra.mxu0 0.0
      %136 = vmatprep.subr.mxu0 0.0
      %137 = vmatpush2.msra.mxu0 0.0
      %138 = vmatprep.subr.mxu0 0.0
      %139 = vmatpush2.msra.mxu0 0.0
      %140 = vmatprep.subr.mxu0 0.0
      %141 = vmatpush2.msra.mxu0 0.0
      %142 = vmatprep.subr.mxu0 0.0
      %143 = vmatpush2.msra.mxu0 0.0
      %144 = vmatprep.subr.mxu0 0.0
      %145 = vmatpush2.msra.mxu0 0.0
      %146 = vmatprep.subr.mxu0 0.0
      %147 = vmatpush2.msra.mxu0 0.0
      %148 = vmatprep.subr.mxu0 0.0
      %149 = vmatpush2.msra.mxu0 0.0
      %150 = vmatprep.subr.mxu0 0.0
      %151 = vmatpush2.msra.mxu0 0.0
      %152 = vmatprep.subr.mxu0 0.0
      %153 = vmatpush2.msra.mxu0 0.0
      %154 = vmatprep.subr.mxu0 0.0
      %155 = vmatpush2.msra.mxu0 0.0
      %156 = vmatprep.mubr.f32.mxu0 0.0
      %157 = vmatmul.mubr.f32.gmra.mxu0 %v87
      %v158 = vpop.f32.mrf.mxu0
      %v159 = vadd.f32 %v83, %v158
      %v160 = vpop.f32.mrf.mxu0
      %161 = vmatprep.mubr.f32.mxu0 0.0
      %162 = vmatmul.mubr.f32.gmra.mxu0 %v90
      %v163 = vpop.f32.mrf.mxu0
      %v164 = vadd.f32 %v83, %v163
      %v165 = vpop.f32.mrf.mxu0
      %166 = vdwg.mxu0
      %v167 = vmul.f32 %v159, 0.5
      %v168 = vmul.f32 %v164, 0.5
      %v169 = vmul.f32 %v159, 0.70710677
      %v170 = vmul.f32 %v164, 0.70710677
      %v171 = verf.f32.pop %v169
      %v172 = verf.f32.pop %v170
      %v173 = vadd.f32 %v171, 1.0
      %v174 = vadd.f32 %v172, 1.0
      %v175 = vmul.f32 %v167, %v173
      %v176 = vmul.f32 %v168, %v174
      %v177 = vsel %vm85, %v175, 0.0
      %178 = vadd.xlane.f32.xlu0 %v177
      %v179 = vpop.xlane.xlu0 %178
      %v180 = vsel %vm85, %v176, 0.0
      %181 = vadd.xlane.f32.xlu0 %v180
      %v182 = vpop.xlane.xlu0 %181
      %v183 = vrcp.pop 32.0
      %v184 = vmul.f32 %v179, %v183
      %v185 = vmul.f32 %v182, %v183
      %v186 = vsub.f32 %v175, %v184
      %v187 = vsub.f32 %v176, %v185
      %v188 = vmul.f32 %v186, %v186
      %v189 = vmul.f32 %v187, %v187
      %v190 = vsel %vm85, %v188, 0.0
      %191 = vadd.xlane.f32.xlu0 %v190
      %v192 = vpop.xlane.xlu0 %191
      %v193 = vsel %vm85, %v189, 0.0
      %194 = vadd.xlane.f32.xlu0 %v193
      %v195 = vpop.xlane.xlu0 %194
      %v196 = vmul.f32 %v192, %v183
      %v197 = vmul.f32 %v195, %v183
      %v198 = vadd.f32 %v196, 1e-12
      %v199 = vadd.f32 %v197, 1e-12
      %v200 = vrsqrt.pop %v198
      %v201 = vrsqrt.pop %v199
      %v202 = vmul.f32 %v186, %v200
      %v203 = vmul.f32 %v187, %v201
      %v204 = vld [vmem:[%s3] sm:$0x1]
      %v206 = vlaneseq
      %v207 = vshrl.u32 %v206, 7
      %v208 = vsub.s32 0, %v207
      %v209 = vrot.slane %v204, %v208
      %v211 = vmul.f32 %v202, %v209
      %v212 = vmul.f32 %v203, %v209
      %v213 = vld [vmem:[%s4] sm:$0x1]
      %v215 = vlaneseq
      %v216 = vshrl.u32 %v215, 7
      %v217 = vsub.s32 0, %v216
      %v218 = vrot.slane %v213, %v217
      %v220 = vadd.f32 %v211, %v218
      %v221 = vadd.f32 %v212, %v218
      %222 = vst.msk [vmem:[#allocation2] sm:$0xff] %vm85, %v220
      %223 = vst.msk [vmem:[#allocation2 + $0x8] sm:$0xff] %vm85, %v221
    $region45: #{tpu_custom_call.1} parent=1 // pred_fallthru
      _
    %v224 = vld [vmem:[#allocation2] sm:$0xff]
    %v225 = vld [vmem:[#allocation2 + $0x8] sm:$0xff]
    %v226 = vld [vmem:[#allocation8] sm:$0xff]
    %v227 = vld [vmem:[#allocation8 + $0x8] sm:$0xff]
    %v228 = vld [vmem:[#allocation8 + $0x10] sm:$0xff]
    %v229 = vld [vmem:[#allocation8 + $0x18] sm:$0xff]
    %v230 = vld [vmem:[%s6] sm:$0x1]
    %v232 = vlaneseq
    %v233 = vshrl.u32 %v232, 7
    %v234 = vsub.s32 0, %v233
    %v235 = vrot.slane %v230, %v234
    %vm237 = vcmask 261120
    %v239 = vsel %vm237, %v224, 0
    %v242 = vsel %vm237, %v225, 0
    %244 = vmatprep.subr.mxu0 0.0
    %245 = vmatpush1.msra.mxu0 0.0
    %246 = vmatprep.subr.mxu0 0.0
    %247 = vmatpush1.msra.mxu0 0.0
    %248 = vmatprep.subr.mxu0 0.0
    %249 = vmatpush1.msra.mxu0 0.0
    %250 = vmatprep.subr.mxu0 0.0
    %251 = vmatpush1.msra.mxu0 0.0
    %252 = vmatprep.subr.mxu0 0.0
    %253 = vmatpush1.msra.mxu0 0.0
    %254 = vmatprep.subr.mxu0 0.0
    %255 = vmatpush1.msra.mxu0 0.0
    %256 = vmatprep.subr.mxu0 0.0
    %257 = vmatpush1.msra.mxu0 0.0
    %258 = vmatprep.subr.mxu0 0.0
    %259 = vmatpush1.msra.mxu0 0.0
    %260 = vmatprep.subr.mxu0 0.0
    %261 = vmatpush1.msra.mxu0 0.0
    %262 = vmatprep.subr.mxu0 0.0
    %263 = vmatpush1.msra.mxu0 0.0
    %264 = vmatprep.subr.mxu0 0.0
    %265 = vmatpush1.msra.mxu0 0.0
    %266 = vmatprep.subr.mxu0 0.0
    %267 = vmatpush1.msra.mxu0 0.0
    %268 = vmatprep.subr.mxu0 0.0
    %269 = vmatpush1.msra.mxu0 %v229
    %270 = vmatprep.subr.mxu0 0.0
    %271 = vmatpush1.msra.mxu0 %v228
    %272 = vmatprep.subr.mxu0 0.0
    %273 = vmatpush1.msra.mxu0 %v227
    %274 = vmatprep.subr.mxu0 0.0
    %275 = vmatpush1.msra.mxu0 %v226
    %276 = vmatprep.subr.mxu0 0.0
    %277 = vmatpush2.msra.mxu0 0.0
    %278 = vmatprep.subr.mxu0 0.0
    %279 = vmatpush2.msra.mxu0 0.0
    %280 = vmatprep.subr.mxu0 0.0
    %281 = vmatpush2.msra.mxu0 0.0
    %282 = vmatprep.subr.mxu0 0.0
    %283 = vmatpush2.msra.mxu0 0.0
    %284 = vmatprep.subr.mxu0 0.0
    %285 = vmatpush2.msra.mxu0 0.0
    %286 = vmatprep.subr.mxu0 0.0
    %287 = vmatpush2.msra.mxu0 0.0
    %288 = vmatprep.subr.mxu0 0.0
    %289 = vmatpush2.msra.mxu0 0.0
    %290 = vmatprep.subr.mxu0 0.0
    %291 = vmatpush2.msra.mxu0 0.0
    %292 = vmatprep.subr.mxu0 0.0
    %293 = vmatpush2.msra.mxu0 0.0
    %294 = vmatprep.subr.mxu0 0.0
    %295 = vmatpush2.msra.mxu0 0.0
    %296 = vmatprep.subr.mxu0 0.0
    %297 = vmatpush2.msra.mxu0 0.0
    %298 = vmatprep.subr.mxu0 0.0
    %299 = vmatpush2.msra.mxu0 0.0
    %300 = vmatprep.subr.mxu0 0.0
    %301 = vmatpush2.msra.mxu0 0.0
    %302 = vmatprep.subr.mxu0 0.0
    %303 = vmatpush2.msra.mxu0 0.0
    %304 = vmatprep.subr.mxu0 0.0
    %305 = vmatpush2.msra.mxu0 0.0
    %306 = vmatprep.subr.mxu0 0.0
    %307 = vmatpush2.msra.mxu0 0.0
    %308 = vmatprep.mubr.f32.mxu0 0.0
    %309 = vmatmul.mubr.f32.gmra.mxu0 %v239
    %v310 = vpop.f32.mrf.mxu0
    %v311 = vadd.f32 %v235, %v310
    %v312 = vpop.f32.mrf.mxu0
    %313 = vmatprep.mubr.f32.mxu0 0.0
    %314 = vmatmul.mubr.f32.gmra.mxu0 %v242
    %v315 = vpop.f32.mrf.mxu0
    %v316 = vadd.f32 %v235, %v315
    %v317 = vpop.f32.mrf.mxu0
    %318 = vdwg.mxu0
    %319 = vst [vmem:[#allocation9] sm:$0xff] %v311
    %320 = vst [vmem:[#allocation9 + $0x8] sm:$0xff] %v316
    // Predicated region
    $region46: #{tpu_custom_call.1} parent=1 // pred_check
      _
    $region47: #{tpu_custom_call.1} parent=1 // pred_check_branch
      %322 = sbr.rel (0) target = $region49
    $region48: #{tpu_custom_call.1} parent=1 // pred_region
      %s324 = ssub.s32 256, 256
      %325 = vsyncadd [#allocation5], %s324
      %s326 = sshll.u32 [#allocation9], 4
      %s327 = int_to_ptr.vmem [resolvable:$true] %s326
      %332 = dma.vmem_to_hbm [thread:$0]  %s327, 256, %s7, [#allocation5], 128, 128, 8
    $region49: #{tpu_custom_call.1} parent=1 // pred_fallthru
      _
    // Predicated region
    $region50: #{tpu_custom_call.1} parent=1 // pred_check
      _
    $region51: #{tpu_custom_call.1} parent=1 // pred_check_branch
      %334 = sbr.rel (0) target = $region53
    $region52: #{tpu_custom_call.1} parent=1 // pred_region
      %335 = dma.done [#allocation5], 256
    $region53: #{tpu_custom_call.1} parent=1 // pred_fallthru
      _
    %336 = vsyncpa [#allocation4], 1
    %337 = vsyncpa [#allocation7], 1
    %338 = vsyncpa [#allocation5], 1

// kernel: tpu_custom_call.1
$region0: #{tpu_custom_call.1}
  #allocation0 [shape = 'u32[]', space=smem, size = 0x4, offset = 0x4, fixed_abs, tag = 'smem constant byte address 0x4 - core index']
  #allocation1 [shape = 'u32[144,128]{1,0:T(1,128)}', space=vmem, size = 0x12000, scoped, tag = 'internal scratch']
  #allocation2 [shape = 'f32[16,32]{1,0:T(8,128)}', space=vmem, size = 0x2000, scoped, tag = 'scratch operand']
  %s0 = inlined_call_operand.hbm [shape: f32[16,32], index: 0, kind: input, shape index: {}]
  %s1 = inlined_call_operand.hbm [shape: f32[32,32], index: 1, kind: input, shape index: {}]
  %s2 = inlined_call_operand.vmem [shape: f32[1,32], index: 2, kind: input, shape index: {}]
  %s3 = inlined_call_operand.vmem [shape: f32[1,32], index: 3, kind: input, shape index: {}]
  %s4 = inlined_call_operand.vmem [shape: f32[1,32], index: 4, kind: input, shape index: {}]
  %s5 = inlined_call_operand.hbm [shape: f32[32,128], index: 5, kind: input, shape index: {}]
  %s6 = inlined_call_operand.vmem [shape: f32[1,128], index: 6, kind: input, shape index: {}]
  %s7 = inlined_call_operand.hbm [shape: f32[16,128], index: 7, kind: output, shape index: {}]
  %s8 = sld [smem:[#allocation0]]
  $region54: #{tpu_custom_call.1} parent=0
    _
  %s10 = ssub.s32 1, %s8
  %s11 = scalar_select 0, %s10, %s8
  $region1: #{tpu_custom_call.1} parent=0
    #allocation3 [shape = 'u8[8192]{0}', space=vmem, size = 0x2000, scoped, tag = 'input window, operand 0, single buffered']
    #allocation4 [shape = 's32[1]{0}', space=sflag, size = 0x4, scoped, tag = 'scoped memory for tpu_custom_call.1']
    #allocation5 [shape = 's32[1]{0}', space=sflag, size = 0x4, scoped, tag = 'scoped memory for tpu_custom_call.1']
    #allocation6 [shape = 'u8[16384]{0}', space=vmem, size = 0x4000, scoped, tag = 'input window, operand 1, single buffered']
    #allocation7 [shape = 's32[1]{0}', space=sflag, size = 0x4, scoped, tag = 'scoped memory for tpu_custom_call.1']
    #allocation8 [shape = 'u8[16384]{0}', space=vmem, size = 0x4000, scoped, tag = 'input window, operand 5, single buffered']
    #allocation9 [shape = 'u8[8192]{0}', space=vmem, size = 0x2000, scoped, tag = 'output window, operand 0, single buffered']
    %12 = vsyncpa [#allocation4], 0
    %13 = vsyncpa [#allocation7], 0
    %14 = vsyncpa [#allocation5], 0
    // Predicated region
    $region2: #{tpu_custom_call.1} parent=1 // pred_check
      _
    $region3: #{tpu_custom_call.1} parent=1 // pred_check_branch
      %16 = sbr.rel (0) target = $region5
    $region4: #{tpu_custom_call.1} parent=1 // pred_region
      %s18 = ssub.s32 256, 256
      %19 = vsyncadd [#allocation4], %s18
      %s20 = sshll.u32 [#allocation3], 4
      %s21 = int_to_ptr.vmem [resolvable:$true] %s20
      %26 = dma.hbm_to_vmem [thread:$0]  %s0, 256, %s21, [#allocation4], 128, 128, 8
    $region5: #{tpu_custom_call.1} parent=1 // pred_fallthru
      _
    // Predicated region
    $region6: #{tpu_custom_call.1} parent=1 // pred_check
      _
    $region7: #{tpu_custom_call.1} parent=1 // pred_check_branch
      %28 = sbr.rel (0) target = $region9
    $region8: #{tpu_custom_call.1} parent=1 // pred_region
      %s30 = ssub.s32 512, 512
      %31 = vsyncadd [#allocation7], %s30
      %s32 = sshll.u32 [#allocation6], 4
      %s33 = int_to_ptr.vmem [resolvable:$true] %s32
      %38 = dma.hbm_to_vmem [thread:$0]  %s1, 512, %s33, [#allocation7], 128, 128, 8
    $region9: #{tpu_custom_call.1} parent=1 // pred_fallthru
      _
    // Predicated region
    $region10: #{tpu_custom_call.1} parent=1 // pred_check
      _
    $region11: #{tpu_custom_call.1} parent=1 // pred_check_branch
      %40 = sbr.rel (0) target = $region13
    $region12: #{tpu_custom_call.1} parent=1 // pred_region
      _
    $region13: #{tpu_custom_call.1} parent=1 // pred_fallthru
      _
    // Predicated region
    $region14: #{tpu_custom_call.1} parent=1 // pred_check
      _
    $region15: #{tpu_custom_call.1} parent=1 // pred_check_branch
      %42 = sbr.rel (0) target = $region17
    $region16: #{tpu_custom_call.1} parent=1 // pred_region
      _
    $region17: #{tpu_custom_call.1} parent=1 // pred_fallthru
      _
    // Predicated region
    $region18: #{tpu_custom_call.1} parent=1 // pred_check
      _
    $region19: #{tpu_custom_call.1} parent=1 // pred_check_branch
      %44 = sbr.rel (0) target = $region21
    $region20: #{tpu_custom_call.1} parent=1 // pred_region
      _
    $region21: #{tpu_custom_call.1} parent=1 // pred_fallthru
      _
    // Predicated region
    $region22: #{tpu_custom_call.1} parent=1 // pred_check
      _
    $region23: #{tpu_custom_call.1} parent=1 // pred_check_branch
      %46 = sbr.rel (0) target = $region25
    $region24: #{tpu_custom_call.1} parent=1 // pred_region
      %s48 = ssub.s32 512, 512
      %49 = vsyncadd [#allocation7], %s48
      %s50 = sshll.u32 [#allocation8], 4
      %s51 = int_to_ptr.vmem [resolvable:$true] %s50
      %56 = dma.hbm_to_vmem [thread:$0]  %s5, 512, %s51, [#allocation7], 128, 128, 8
    $region25: #{tpu_custom_call.1} parent=1 // pred_fallthru
      _
    // Predicated region
    $region26: #{tpu_custom_call.1} parent=1 // pred_check
      _
    $region27: #{tpu_custom_call.1} parent=1 // pred_check_branch
      %58 = sbr.rel (0) target = $region29
    $region28: #{tpu_custom_call.1} parent=1 // pred_region
      _
    $region29: #{tpu_custom_call.1} parent=1 // pred_fallthru
      _
    // Predicated region
    $region30: #{tpu_custom_call.1} parent=1 // pred_check
      _
    $region31: #{tpu_custom_call.1} parent=1 // pred_check_branch
      %60 = sbr.rel (0) target = $region33
    $region32: #{tpu_custom_call.1} parent=1 // pred_region
      %61 = dma.done [#allocation4], 256
    $region33: #{tpu_custom_call.1} parent=1 // pred_fallthru
      _
    // Predicated region
    $region34: #{tpu_custom_call.1} parent=1 // pred_check
      _
    $region35: #{tpu_custom_call.1} parent=1 // pred_check_branch
      %63 = sbr.rel (0) target = $region37
    $region36: #{tpu_custom_call.1} parent=1 // pred_region
      %64 = dma.done [#allocation7], 512
    $region37: #{tpu_custom_call.1} parent=1 // pred_fallthru
      _
    // Predicated region
    $region38: #{tpu_custom_call.1} parent=1 // pred_check
      _
    $region39: #{tpu_custom_call.1} parent=1 // pred_check_branch
      %66 = sbr.rel (0) target = $region41
    $region40: #{tpu_custom_call.1} parent=1 // pred_region
      %67 = dma.done [#allocation7], 512
    $region41: #{tpu_custom_call.1} parent=1 // pred_fallthru
      _
    %p68 = scmp.eq.s32.totalorder 0, 0
    // Predicated region
    $region42: #{tpu_custom_call.1} parent=1 // pred_check
      %p69 = pneg %p68
    $region43: #{tpu_custom_call.1} parent=1 // pred_check_branch
      %71 = sbr.rel (%p69) target = $region45
    $region44: #{tpu_custom_call.1} parent=1 // pred_region
      %v72 = vld [vmem:[#allocation3] sm:$0xff]
      %v73 = vld [vmem:[#allocation3 + $0x8] sm:$0xff]
      %v74 = vld [vmem:[#allocation6] sm:$0xff]
      %v75 = vld [vmem:[#allocation6 + $0x8] sm:$0xff]
      %v76 = vld [vmem:[#allocation6 + $0x10] sm:$0xff]
      %v77 = vld [vmem:[#allocation6 + $0x18] sm:$0xff]
      %v78 = vld [vmem:[%s2] sm:$0x1]
      %v80 = vlaneseq
      %v81 = vshrl.u32 %v80, 7
      %v82 = vsub.s32 0, %v81
      %v83 = vrot.slane %v78, %v82
      %vm85 = vcmask 261120
      %v87 = vsel %vm85, %v72, 0
      %v90 = vsel %vm85, %v73, 0
      %92 = vmatprep.subr.mxu0 0.0
      %93 = vmatpush1.msra.mxu0 0.0
      %94 = vmatprep.subr.mxu0 0.0
      %95 = vmatpush1.msra.mxu0 0.0
      %96 = vmatprep.subr.mxu0 0.0
      %97 = vmatpush1.msra.mxu0 0.0
      %98 = vmatprep.subr.mxu0 0.0
      %99 = vmatpush1.msra.mxu0 0.0
      %100 = vmatprep.subr.mxu0 0.0
      %101 = vmatpush1.msra.mxu0 0.0
      %102 = vmatprep.subr.mxu0 0.0
      %103 = vmatpush1.msra.mxu0 0.0
      %104 = vmatprep.subr.mxu0 0.0
      %105 = vmatpush1.msra.mxu0 0.0
      %106 = vmatprep.subr.mxu0 0.0
      %107 = vmatpush1.msra.mxu0 0.0
      %108 = vmatprep.subr.mxu0 0.0
      %109 = vmatpush1.msra.mxu0 0.0
      %110 = vmatprep.subr.mxu0 0.0
      %111 = vmatpush1.msra.mxu0 0.0
      %112 = vmatprep.subr.mxu0 0.0
      %113 = vmatpush1.msra.mxu0 0.0
      %114 = vmatprep.subr.mxu0 0.0
      %115 = vmatpush1.msra.mxu0 0.0
      %116 = vmatprep.subr.mxu0 0.0
      %117 = vmatpush1.msra.mxu0 %v77
      %118 = vmatprep.subr.mxu0 0.0
      %119 = vmatpush1.msra.mxu0 %v76
      %120 = vmatprep.subr.mxu0 0.0
      %121 = vmatpush1.msra.mxu0 %v75
      %122 = vmatprep.subr.mxu0 0.0
      %123 = vmatpush1.msra.mxu0 %v74
      %124 = vmatprep.subr.mxu0 0.0
      %125 = vmatpush2.msra.mxu0 0.0
      %126 = vmatprep.subr.mxu0 0.0
      %127 = vmatpush2.msra.mxu0 0.0
      %128 = vmatprep.subr.mxu0 0.0
      %129 = vmatpush2.msra.mxu0 0.0
      %130 = vmatprep.subr.mxu0 0.0
      %131 = vmatpush2.msra.mxu0 0.0
      %132 = vmatprep.subr.mxu0 0.0
      %133 = vmatpush2.msra.mxu0 0.0
      %134 = vmatprep.subr.mxu0 0.0
      %135 = vmatpush2.msra.mxu0 0.0
      %136 = vmatprep.subr.mxu0 0.0
      %137 = vmatpush2.msra.mxu0 0.0
      %138 = vmatprep.subr.mxu0 0.0
      %139 = vmatpush2.msra.mxu0 0.0
      %140 = vmatprep.subr.mxu0 0.0
      %141 = vmatpush2.msra.mxu0 0.0
      %142 = vmatprep.subr.mxu0 0.0
      %143 = vmatpush2.msra.mxu0 0.0
      %144 = vmatprep.subr.mxu0 0.0
      %145 = vmatpush2.msra.mxu0 0.0
      %146 = vmatprep.subr.mxu0 0.0
      %147 = vmatpush2.msra.mxu0 0.0
      %148 = vmatprep.subr.mxu0 0.0
      %149 = vmatpush2.msra.mxu0 0.0
      %150 = vmatprep.subr.mxu0 0.0
      %151 = vmatpush2.msra.mxu0 0.0
      %152 = vmatprep.subr.mxu0 0.0
      %153 = vmatpush2.msra.mxu0 0.0
      %154 = vmatprep.subr.mxu0 0.0
      %155 = vmatpush2.msra.mxu0 0.0
      %156 = vmatprep.mubr.f32.mxu0 0.0
      %157 = vmatmul.mubr.f32.gmra.mxu0 %v87
      %v158 = vpop.f32.mrf.mxu0
      %v159 = vadd.f32 %v83, %v158
      %v160 = vpop.f32.mrf.mxu0
      %161 = vmatprep.mubr.f32.mxu0 0.0
      %162 = vmatmul.mubr.f32.gmra.mxu0 %v90
      %v163 = vpop.f32.mrf.mxu0
      %v164 = vadd.f32 %v83, %v163
      %v165 = vpop.f32.mrf.mxu0
      %166 = vdwg.mxu0
      %v167 = vmul.f32 %v159, 0.5
      %v168 = vmul.f32 %v164, 0.5
      %v169 = vmul.f32 %v159, 0.70710677
      %v170 = vmul.f32 %v164, 0.70710677
      %v171 = verf.f32.pop %v169
      %v172 = verf.f32.pop %v170
      %v173 = vadd.f32 %v171, 1.0
      %v174 = vadd.f32 %v172, 1.0
      %v175 = vmul.f32 %v167, %v173
      %v176 = vmul.f32 %v168, %v174
      %v177 = vsel %vm85, %v175, 0.0
      %178 = vadd.xlane.f32.xlu0 %v177
      %v179 = vpop.xlane.xlu0 %178
      %v180 = vsel %vm85, %v176, 0.0
      %181 = vadd.xlane.f32.xlu0 %v180
      %v182 = vpop.xlane.xlu0 %181
      %v183 = vrcp.pop 32.0
      %v184 = vmul.f32 %v179, %v183
      %v185 = vmul.f32 %v182, %v183
      %v186 = vsub.f32 %v175, %v184
      %v187 = vsub.f32 %v176, %v185
      %v188 = vmul.f32 %v186, %v186
      %v189 = vmul.f32 %v187, %v187
      %v190 = vsel %vm85, %v188, 0.0
      %191 = vadd.xlane.f32.xlu0 %v190
      %v192 = vpop.xlane.xlu0 %191
      %v193 = vsel %vm85, %v189, 0.0
      %194 = vadd.xlane.f32.xlu0 %v193
      %v195 = vpop.xlane.xlu0 %194
      %v196 = vmul.f32 %v192, %v183
      %v197 = vmul.f32 %v195, %v183
      %v198 = vadd.f32 %v196, 1e-12
      %v199 = vadd.f32 %v197, 1e-12
      %v200 = vrsqrt.pop %v198
      %v201 = vrsqrt.pop %v199
      %v202 = vmul.f32 %v186, %v200
      %v203 = vmul.f32 %v187, %v201
      %v204 = vld [vmem:[%s3] sm:$0x1]
      %v206 = vlaneseq
      %v207 = vshrl.u32 %v206, 7
      %v208 = vsub.s32 0, %v207
      %v209 = vrot.slane %v204, %v208
      %v211 = vmul.f32 %v202, %v209
      %v212 = vmul.f32 %v203, %v209
      %v213 = vld [vmem:[%s4] sm:$0x1]
      %v215 = vlaneseq
      %v216 = vshrl.u32 %v215, 7
      %v217 = vsub.s32 0, %v216
      %v218 = vrot.slane %v213, %v217
      %v220 = vadd.f32 %v211, %v218
      %v221 = vadd.f32 %v212, %v218
      %222 = vst.msk [vmem:[#allocation2] sm:$0xff] %vm85, %v220
      %223 = vst.msk [vmem:[#allocation2 + $0x8] sm:$0xff] %vm85, %v221
    $region45: #{tpu_custom_call.1} parent=1 // pred_fallthru
      _
    %v224 = vld [vmem:[#allocation2] sm:$0xff]
    %v225 = vld [vmem:[#allocation2 + $0x8] sm:$0xff]
    %v226 = vld [vmem:[#allocation8] sm:$0xff]
    %v227 = vld [vmem:[#allocation8 + $0x8] sm:$0xff]
    %v228 = vld [vmem:[#allocation8 + $0x10] sm:$0xff]
    %v229 = vld [vmem:[#allocation8 + $0x18] sm:$0xff]
    %v230 = vld [vmem:[%s6] sm:$0x1]
    %v232 = vlaneseq
    %v233 = vshrl.u32 %v232, 7
    %v234 = vsub.s32 0, %v233
    %v235 = vrot.slane %v230, %v234
    %vm237 = vcmask 261120
    %v239 = vsel %vm237, %v224, 0
    %v242 = vsel %vm237, %v225, 0
    %244 = vmatprep.subr.mxu0 0.0
    %245 = vmatpush1.msra.mxu0 0.0
    %246 = vmatprep.subr.mxu0 0.0
    %247 = vmatpush1.msra.mxu0 0.0
    %248 = vmatprep.subr.mxu0 0.0
    %249 = vmatpush1.msra.mxu0 0.0
    %250 = vmatprep.subr.mxu0 0.0
    %251 = vmatpush1.msra.mxu0 0.0
    %252 = vmatprep.subr.mxu0 0.0
    %253 = vmatpush1.msra.mxu0 0.0
    %254 = vmatprep.subr.mxu0 0.0
    %255 = vmatpush1.msra.mxu0 0.0
    %256 = vmatprep.subr.mxu0 0.0
    %257 = vmatpush1.msra.mxu0 0.0
    %258 = vmatprep.subr.mxu0 0.0
    %259 = vmatpush1.msra.mxu0 0.0
    %260 = vmatprep.subr.mxu0 0.0
    %261 = vmatpush1.msra.mxu0 0.0
    %262 = vmatprep.subr.mxu0 0.0
    %263 = vmatpush1.msra.mxu0 0.0
    %264 = vmatprep.subr.mxu0 0.0
    %265 = vmatpush1.msra.mxu0 0.0
    %266 = vmatprep.subr.mxu0 0.0
    %267 = vmatpush1.msra.mxu0 0.0
    %268 = vmatprep.subr.mxu0 0.0
    %269 = vmatpush1.msra.mxu0 %v229
    %270 = vmatprep.subr.mxu0 0.0
    %271 = vmatpush1.msra.mxu0 %v228
    %272 = vmatprep.subr.mxu0 0.0
    %273 = vmatpush1.msra.mxu0 %v227
    %274 = vmatprep.subr.mxu0 0.0
    %275 = vmatpush1.msra.mxu0 %v226
    %276 = vmatprep.subr.mxu0 0.0
    %277 = vmatpush2.msra.mxu0 0.0
    %278 = vmatprep.subr.mxu0 0.0
    %279 = vmatpush2.msra.mxu0 0.0
    %280 = vmatprep.subr.mxu0 0.0
    %281 = vmatpush2.msra.mxu0 0.0
    %282 = vmatprep.subr.mxu0 0.0
    %283 = vmatpush2.msra.mxu0 0.0
    %284 = vmatprep.subr.mxu0 0.0
    %285 = vmatpush2.msra.mxu0 0.0
    %286 = vmatprep.subr.mxu0 0.0
    %287 = vmatpush2.msra.mxu0 0.0
    %288 = vmatprep.subr.mxu0 0.0
    %289 = vmatpush2.msra.mxu0 0.0
    %290 = vmatprep.subr.mxu0 0.0
    %291 = vmatpush2.msra.mxu0 0.0
    %292 = vmatprep.subr.mxu0 0.0
    %293 = vmatpush2.msra.mxu0 0.0
    %294 = vmatprep.subr.mxu0 0.0
    %295 = vmatpush2.msra.mxu0 0.0
    %296 = vmatprep.subr.mxu0 0.0
    %297 = vmatpush2.msra.mxu0 0.0
    %298 = vmatprep.subr.mxu0 0.0
    %299 = vmatpush2.msra.mxu0 0.0
    %300 = vmatprep.subr.mxu0 0.0
    %301 = vmatpush2.msra.mxu0 0.0
    %302 = vmatprep.subr.mxu0 0.0
    %303 = vmatpush2.msra.mxu0 0.0
    %304 = vmatprep.subr.mxu0 0.0
    %305 = vmatpush2.msra.mxu0 0.0
    %306 = vmatprep.subr.mxu0 0.0
    %307 = vmatpush2.msra.mxu0 0.0
    %308 = vmatprep.mubr.f32.mxu0 0.0
    %309 = vmatmul.mubr.f32.gmra.mxu0 %v239
    %v310 = vpop.f32.mrf.mxu0
    %v311 = vadd.f32 %v235, %v310
    %v312 = vpop.f32.mrf.mxu0
    %313 = vmatprep.mubr.f32.mxu0 0.0
    %314 = vmatmul.mubr.f32.gmra.mxu0 %v242
    %v315 = vpop.f32.mrf.mxu0
    %v316 = vadd.f32 %v235, %v315
    %v317 = vpop.f32.mrf.mxu0
    %318 = vdwg.mxu0
    %319 = vst [vmem:[#allocation9] sm:$0xff] %v311
    %320 = vst [vmem:[#allocation9 + $0x8] sm:$0xff] %v316
    // Predicated region
    $region46: #{tpu_custom_call.1} parent=1 // pred_check
      _
    $region47: #{tpu_custom_call.1} parent=1 // pred_check_branch
      %322 = sbr.rel (0) target = $region49
    $region48: #{tpu_custom_call.1} parent=1 // pred_region
      %s324 = ssub.s32 256, 256
      %325 = vsyncadd [#allocation5], %s324
      %s326 = sshll.u32 [#allocation9], 4
      %s327 = int_to_ptr.vmem [resolvable:$true] %s326
      %332 = dma.vmem_to_hbm [thread:$0]  %s327, 256, %s7, [#allocation5], 128, 128, 8
    $region49: #{tpu_custom_call.1} parent=1 // pred_fallthru
      _
    // Predicated region
    $region50: #{tpu_custom_call.1} parent=1 // pred_check
      _
    $region51: #{tpu_custom_call.1} parent=1 // pred_check_branch
      %334 = sbr.rel (0) target = $region53
    $region52: #{tpu_custom_call.1} parent=1 // pred_region
      %335 = dma.done [#allocation5], 256
    $region53: #{tpu_custom_call.1} parent=1 // pred_fallthru
      _
    %336 = vsyncpa [#allocation4], 1
    %337 = vsyncpa [#allocation7], 1
    %338 = vsyncpa [#allocation5], 1

</llo_original>
